<compile_context>
chip_gen: v6e
topology: v6e:2x2x1
jax: 0.10.0
libtpu: 0.0.40
codegen_flags: <defaults>
</compile_context>

<pallas_src>
import functools

import jax
import jax.numpy as jnp
from jax.experimental import pallas as pl
from jax.experimental.pallas import tpu as pltpu


# ----------------------------- small helpers -------------------------------

def _vmem_specs(n):
    return [pl.BlockSpec(memory_space=pltpu.MemorySpace.VMEM) for _ in range(n)]


def _layernorm(v, w, b, eps=1e-5):
    # matches torch LayerNorm subclass (fp32 math); single fused reduction pass.
    mu = jnp.mean(v, axis=-1, keepdims=True)
    mu2 = jnp.mean(v * v, axis=-1, keepdims=True)
    var = mu2 - mu * mu
    return (v - mu) * jax.lax.rsqrt(var + eps) * w + b


def _device_config():
    """Generation-specific tuning (cores per chip, VMEM budget, bf16 GELU)."""
    kind = ''
    try:
        kind = jax.devices()[0].device_kind.lower()
    except Exception:  # pragma: no cover - defensive
        pass
    if 'v7' in kind:        # 2 TensorCores, 64 MiB VMEM per core
        return dict(n_cores=2, vmem_limit=48 * 1024 * 1024, gelu_bf16=True)
    if 'v6' in kind:        # 1 TensorCore, 128 MiB VMEM, bf16 VPU/EUP
        return dict(n_cores=1, vmem_limit=96 * 1024 * 1024, gelu_bf16=True)
    if 'v5 lite' in kind or 'v5e' in kind or 'v5lite' in kind:
        return dict(n_cores=1, vmem_limit=64 * 1024 * 1024, gelu_bf16=False)
    return dict(n_cores=1, vmem_limit=32 * 1024 * 1024, gelu_bf16=False)


def _select_batch_tile(B, S, W, H, n_cores, vmem_bytes):
    """One batch tile per TensorCore, capped so activations plus the
    double-buffered bf16 weight stream fit comfortably in VMEM."""
    weight_bytes = 48 * W * W + (1 << 20)          # 2x-buffered bf16 weights + biases
    budget = int(vmem_bytes * 0.6) - weight_bytes
    per_tb = S * 80 * W + 6 * H * S * S            # rough transient bytes per batch row
    cap = max(1, budget // max(per_tb, 1))
    want = -(-B // max(n_cores, 1))                # ceil(B / n_cores)
    return max(1, min(want, cap, B))


# ------------------ transformer trunk (all residual blocks) ----------------

def transformer_layer_kernel(x_ref,
                             ln1w_ref, ln1b_ref, wqkv_ref, bqkv_ref,
                             wout_ref, bout_ref, ln2w_ref, ln2b_ref,
                             wfc_ref, bfc_ref, wproj_ref, bproj_ref,
                             o_ref, *, n_head, gelu_bf16):
    """One residual attention block for one batch tile.

    grid = (batch_tiles, layers).  The output block index is constant along the
    layer axis, so the residual stream stays resident in VMEM across layers
    while the pipeline prefetches the next layer's weights.
    """
    layer = pl.program_id(1)

    @pl.when(layer == 0)
    def _init():
        o_ref[...] = x_ref[...]

    x = o_ref[...].astype(jnp.float32)                # [TB, S, W] residual stream
    TB, S, W = x.shape
    H = n_head
    Dh = W // H

    # Causal mask generated in-kernel (two iotas + select) instead of streaming
    # an [S,S] f32 input.  Finite -1e9 so padded rows can never produce NaN.
    rows = jax.lax.broadcasted_iota(jnp.int32, (S, S), 0)
    cols = jax.lax.broadcasted_iota(jnp.int32, (S, S), 1)
    mask = jnp.where(cols > rows, -1e9, 0.0).astype(jnp.float32)

    # ---- x = x + attn(ln_1(x)) ----
    h = _layernorm(x, ln1w_ref[0], ln1b_ref[0])
    h2d = h.reshape(TB * S, W).astype(jnp.bfloat16)
    # NOTE: 1/sqrt(Dh) is pre-folded into the Q columns of wqkv (and bqkv).
    qkv = jnp.dot(h2d, wqkv_ref[0],
                  preferred_element_type=jnp.float32) + bqkv_ref[0]   # [TB*S, 3W] f32

    # Fold heads into the LEADING batch dim (single-batch-dim dot_general is the
    # only batched matmul form proven to lower on Mosaic here).
    def _heads(base):
        return jnp.concatenate(
            [qkv[:, base + hh * Dh: base + (hh + 1) * Dh].reshape(TB, S, Dh)
             for hh in range(H)], axis=0)             # [H*TB, S, Dh]

    q = _heads(0).astype(jnp.bfloat16)
    k = _heads(W).astype(jnp.bfloat16)
    v = _heads(2 * W).astype(jnp.bfloat16)

    s = jnp.einsum('bqd,bkd->bqk', q, k,
                   preferred_element_type=jnp.float32)                # [H*TB, S, S]
    s = s + mask[None, :, :]
    s = s - jnp.max(s, axis=-1, keepdims=True)        # softmax stats in f32
    p = jnp.exp(s)
    p = p * pl.reciprocal(jnp.sum(p, axis=-1, keepdims=True), approx=True)
    ctx = jnp.einsum('bqk,bkd->bqd', p.astype(jnp.bfloat16), v,
                     preferred_element_type=jnp.float32)              # [H*TB, S, Dh]

    # Re-concatenate heads on the feature dim -> ONE full-K out-projection.
    ctx2d = jnp.concatenate(
        [ctx[hh * TB:(hh + 1) * TB].reshape(TB * S, Dh) for hh in range(H)],
        axis=-1).astype(jnp.bfloat16)                                 # [TB*S, W]
    attn = jnp.dot(ctx2d, wout_ref[0],
                   preferred_element_type=jnp.float32) + bout_ref[0]  # [TB*S, W]
    x = x + attn.reshape(TB, S, W)

    # ---- x = x + mlp(ln_2(x)) ----
    h2 = _layernorm(x, ln2w_ref[0], ln2b_ref[0]).reshape(TB * S, W)
    fc = jnp.dot(h2.astype(jnp.bfloat16), wfc_ref[0],
                 preferred_element_type=jnp.float32) + bfc_ref[0]     # [TB*S, 4W]
    # QuickGELU: bf16 on v6e/v7x (bf16 VPU/EUP), f32 on v5e.
    g = fc.astype(jnp.bfloat16) if gelu_bf16 else fc
    g = g * jax.nn.sigmoid(1.702 * g)
    pr = jnp.dot(g.astype(jnp.bfloat16), wproj_ref[0],
                 preferred_element_type=jnp.float32) + bproj_ref[0]   # [TB*S, W]
    o_ref[...] = (x + pr.reshape(TB, S, W)).astype(o_ref.dtype)


def transformer_call(x, stk, n_head, *, n_cores=1,
                     vmem_limit_bytes=32 * 1024 * 1024, gelu_bf16=False):
    B, S, W = x.shape
    L = stk['wqkv'].shape[0]
    TB = _select_batch_tile(B, S, W, n_head, n_cores, vmem_limit_bytes)
    Bp = pl.cdiv(B, TB) * TB
    if Bp != B:                       # pad batch to a multiple of the tile
        x = jnp.concatenate([x, jnp.zeros((Bp - B, S, W), x.dtype)], axis=0)

    xmap = lambda b, l: (b, 0, 0)     # activation: varies with batch tile only
    wmap = lambda b, l: (l, 0, 0)     # weights:   vary with layer only

    in_specs = [
        pl.BlockSpec((TB, S, W), xmap),             # x
        pl.BlockSpec((1, 1, W), wmap),              # ln1_w
        pl.BlockSpec((1, 1, W), wmap),              # ln1_b
        pl.BlockSpec((1, W, 3 * W), wmap),          # wqkv (bf16)
        pl.BlockSpec((1, 1, 3 * W), wmap),          # bqkv
        pl.BlockSpec((1, W, W), wmap),              # wout (bf16)
        pl.BlockSpec((1, 1, W), wmap),              # bout
        pl.BlockSpec((1, 1, W), wmap),              # ln2_w
        pl.BlockSpec((1, 1, W), wmap),              # ln2_b
        pl.BlockSpec((1, W, 4 * W), wmap),          # wfc (bf16)
        pl.BlockSpec((1, 1, 4 * W), wmap),          # bfc
        pl.BlockSpec((1, 4 * W, W), wmap),          # wproj (bf16)
        pl.BlockSpec((1, 1, W), wmap),              # bproj
    ]

    out = pl.pallas_call(
        functools.partial(transformer_layer_kernel, n_head=n_head,
                          gelu_bf16=gelu_bf16),
        out_shape=jax.ShapeDtypeStruct((Bp, S, W), jnp.float32),
        grid=(Bp // TB, L),
        in_specs=in_specs,
        out_specs=pl.BlockSpec((TB, S, W), xmap),
        compiler_params=pltpu.CompilerParams(
            dimension_semantics=("parallel", "arbitrary"),
            vmem_limit_bytes=vmem_limit_bytes),
    )(x, stk['ln1_w'], stk['ln1_b'], stk['wqkv'], stk['bqkv'],
      stk['wout'], stk['bout'], stk['ln2_w'], stk['ln2_b'],
      stk['wfc'], stk['bfc'], stk['wproj'], stk['bproj'])
    return out[:B]


# ------------- fused text head: LN -> proj -> (mean) -> L2 norm -------------

def text_head_kernel(x_ref, lnw_ref, lnb_ref, proj_ref, o_ref, *, neigh):
    x = x_ref[...].astype(jnp.float32)                        # [N, W] EOT tokens
    h = _layernorm(x, lnw_ref[...], lnb_ref[...])
    t = jnp.dot(h.astype(jnp.bfloat16), proj_ref[...],
                preferred_element_type=jnp.float32)           # [N, E]
    if neigh > 1:
        # mean over groups of `neigh` consecutive rows (no iota matmul)
        N, E = t.shape
        R = N // neigh
        t3 = t.reshape(R, neigh, E)
        acc = t3[:, 0, :]
        for j in range(1, neigh):
            acc = acc + t3[:, j, :]
        t = acc * (1.0 / neigh)
    # fused L2 normalization (matches x / x.norm(dim=-1, keepdim=True))
    o_ref[...] = (t * jax.lax.rsqrt(jnp.sum(t * t, axis=-1, keepdims=True))
                  ).astype(o_ref.dtype)


def text_head_call(x_eot, lnw, lnb, proj, *, neigh=1):
    N, _ = x_eot.shape
    E = proj.shape[1]
    return pl.pallas_call(
        functools.partial(text_head_kernel, neigh=neigh),
        out_shape=jax.ShapeDtypeStruct((N // neigh, E), jnp.float32),
        in_specs=_vmem_specs(4),
        out_specs=pl.BlockSpec(memory_space=pltpu.MemorySpace.VMEM),
    )(x_eot, lnw, lnb, proj)


# ------------------ GNN stand-in fused with L2 normalize -------------------

def gnn_kernel(feat_ref, w_ref, b_ref, o_ref):
    # TODO(synk): graph_transformer ('gt') is undefined in the source; a single
    # linear projection stands in for the GNN.  Row-wise L2 normalization
    # commutes with the row gather embs[s_n], so it is fused here.
    e = jnp.dot(feat_ref[...].astype(jnp.bfloat16), w_ref[...],
                preferred_element_type=jnp.float32) + b_ref[...]
    o_ref[...] = (e * jax.lax.rsqrt(jnp.sum(e * e, axis=-1, keepdims=True))
                  ).astype(o_ref.dtype)


def gnn_call(node_feats, w, b, *, row_block=512):
    N, F = node_feats.shape
    G = w.shape[1]
    RB = min(row_block, N)
    if N % RB != 0:          # toy / ragged node counts: single full block
        RB = N
    return pl.pallas_call(
        gnn_kernel,
        out_shape=jax.ShapeDtypeStruct((N, G), jnp.float32),
        grid=(N // RB,),
        in_specs=[pl.BlockSpec((RB, F), lambda i: (i, 0)),
                  pl.BlockSpec((F, G), lambda i: (0, 0)),
                  pl.BlockSpec((1, G), lambda i: (0, 0))],
        out_specs=pl.BlockSpec((RB, G), lambda i: (i, 0)),
        compiler_params=pltpu.CompilerParams(
            dimension_semantics=("parallel",)),
    )(node_feats, w, b)


# ------------------------------ model glue ---------------------------------

def encode_text_trunk(text, params, stk, n_head, dev_cfg):
    # token embedding + positional embedding + EOT gather are plain-JAX glue.
    x = params['token_embedding'][text] + params['positional_embedding'][None, :, :]
    x = transformer_call(x, stk, n_head,
                         n_cores=dev_cfg['n_cores'],
                         vmem_limit_bytes=dev_cfg['vmem_limit'],
                         gelu_bf16=dev_cfg['gelu_bf16'])
    eot = jnp.argmax(text, axis=-1)
    return x[jnp.arange(text.shape[0]), eot]                  # [N, W]


def clip_forward(params, stk, head, cfg, g_feats, s_n, t_n, s_n_text, t_n_text):
    del t_n  # unused in the reference forward as well
    B = s_n_text.shape[0]
    dev_cfg = _device_config()

    # graph branch (fused matmul + normalize), then gather the train nodes
    embs = gnn_call(g_feats, head['gnn_w'], head['gnn_b'])    # [N, G], rows L2-normed
    s_image_features = embs[s_n]                              # [B, G]

    # both text batches share one transformer launch (fewer calls, fuller tiles)
    all_text = jnp.concatenate([s_n_text, t_n_text], axis=0)
    x_eot = encode_text_trunk(all_text, params, stk, cfg['heads'], dev_cfg)

    s_text_features = text_head_call(
        x_eot[:B], head['ln_final_w'], head['ln_final_b'],
        head['text_projection'], neigh=1)                     # [B, E], normalized
    t_text_features = text_head_call(
        x_eot[B:], head['ln_final_w'], head['ln_final_b'],
        head['text_projection'], neigh=cfg['neigh_num'])      # [B, E], mean+normalized

    labels = jnp.arange(B, dtype=jnp.int32)
    return s_image_features, s_text_features, t_text_features, labels


# ------------------------------ parameters ---------------------------------

def init_params(seed, cfg):
    """PyTorch-faithful parameter init ([out, in] weight layouts)."""
    S, W, L = cfg['context_length'], cfg['width'], cfg['layers']
    V, E = cfg['vocab_size'], cfg['embed_dim']
    F, G = cfg['node_feat_dim'], cfg['gnn_output']

    keys = iter(jax.random.split(jax.random.PRNGKey(seed), 8 + 4 * L))
    nrm = lambda shape, std: std * jax.random.normal(next(keys), shape, jnp.float32)

    proj_std = (W ** -0.5) * ((2 * L) ** -0.5)
    attn_std = W ** -0.5
    fc_std = (2 * W) ** -0.5

    blocks = []
    for _ in range(L):
        blocks.append(dict(
            ln1_w=jnp.ones((W,), jnp.float32), ln1_b=jnp.zeros((W,), jnp.float32),
            in_proj_w=nrm((3 * W, W), attn_std),
            in_proj_b=jnp.zeros((3 * W,), jnp.float32),
            out_proj_w=nrm((W, W), proj_std),
            out_proj_b=jnp.zeros((W,), jnp.float32),
            ln2_w=jnp.ones((W,), jnp.float32), ln2_b=jnp.zeros((W,), jnp.float32),
            fc_w=nrm((4 * W, W), fc_std), fc_b=jnp.zeros((4 * W,), jnp.float32),
            proj_w=nrm((W, 4 * W), proj_std), proj_b=jnp.zeros((W,), jnp.float32),
        ))

    # (causal mask is generated inside the transformer kernel)
    return dict(
        token_embedding=nrm((V, W), 0.02),
        positional_embedding=nrm((S, W), 0.01),
        blocks=blocks,
        ln_final_w=jnp.ones((W,), jnp.float32),
        ln_final_b=jnp.zeros((W,), jnp.float32),
        text_projection=nrm((W, E), W ** -0.5),
        gnn_w=nrm((G, F), 0.02),
        gnn_b=jnp.zeros((G,), jnp.float32),
    )


def prepare_params(params, n_head):
    """Kernel-ready params: per-layer weights stacked along a leading layer axis,
    linear weights pre-transposed to [in, out] and cast to bf16 (f32 accumulation
    in-kernel), 1/sqrt(Dh) folded into the Q columns of the QKV projection."""
    blocks = params['blocks']
    W = blocks[0]['in_proj_w'].shape[1]
    Dh = W // n_head
    scale = Dh ** -0.5
    q_scale = jnp.concatenate(
        [jnp.full((W,), scale, jnp.float32), jnp.ones((2 * W,), jnp.float32)])

    def stack(fn):
        return jnp.stack([fn(b) for b in blocks], axis=0)

    stk = dict(
        ln1_w=stack(lambda b: b['ln1_w'].reshape(1, W)),
        ln1_b=stack(lambda b: b['ln1_b'].reshape(1, W)),
        wqkv=stack(lambda b: (b['in_proj_w'].T * q_scale[None, :]).astype(jnp.bfloat16)),
        bqkv=stack(lambda b: (b['in_proj_b'] * q_scale).reshape(1, 3 * W)),
        wout=stack(lambda b: b['out_proj_w'].T.astype(jnp.bfloat16)),
        bout=stack(lambda b: b['out_proj_b'].reshape(1, W)),
        ln2_w=stack(lambda b: b['ln2_w'].reshape(1, W)),
        ln2_b=stack(lambda b: b['ln2_b'].reshape(1, W)),
        wfc=stack(lambda b: b['fc_w'].T.astype(jnp.bfloat16)),
        bfc=stack(lambda b: b['fc_b'].reshape(1, 4 * W)),
        wproj=stack(lambda b: b['proj_w'].T.astype(jnp.bfloat16)),
        bproj=stack(lambda b: b['proj_b'].reshape(1, W)),
    )
    head = dict(
        ln_final_w=params['ln_final_w'].reshape(1, W),
        ln_final_b=params['ln_final_b'].reshape(1, W),
        text_projection=params['text_projection'].astype(jnp.bfloat16),
        gnn_w=params['gnn_w'].T.astype(jnp.bfloat16),     # [F, G]
        gnn_b=params['gnn_b'].reshape(1, -1),
    )
    return stk, head


# --------------------------------- main -------------------------------------

if __name__ == "__main__":
    B = 2            # number of source nodes (batch)
    S = 8            # context_length
    W = 32           # transformer_width
    H = 4            # transformer_heads
    L = 2            # transformer_layers
    V = 64           # vocab_size
    E = 16           # embed_dim
    NEIGH = 3        # neigh_num
    GOUT = 16        # gnn_output (== embed_dim, as required by the forward)
    N_NODES = 8
    F_NODE = 8

    cfg = dict(context_length=S, width=W, heads=H, layers=L, vocab_size=V,
               embed_dim=E, neigh_num=NEIGH, gnn_output=GOUT,
               node_feat_dim=F_NODE)

    params = init_params(0, cfg)
    stk, head = prepare_params(params, H)

    key = jax.random.PRNGKey(0)
    k1, k2, k3 = jax.random.split(key, 3)
    g_feats = jax.random.normal(k1, (N_NODES, F_NODE), jnp.float32)
    s_n = jnp.array([1, 5], dtype=jnp.int32)                          # idx_train
    t_n = jnp.arange(B * NEIGH, dtype=jnp.int32)                      # unused (as in torch)
    s_n_text = jax.random.randint(k2, (B, S), 0, V).astype(jnp.int32)
    t_n_text = jax.random.randint(k3, (B * NEIGH, S), 0, V).astype(jnp.int32)

    outs = clip_forward(params, stk, head, cfg, g_feats, s_n, t_n, s_n_text, t_n_text)
    outs = jax.block_until_ready(outs)

    s_img, s_txt, t_txt, labels = outs
    assert s_img.shape == (B, GOUT)
    assert s_txt.shape == (B, E)
    assert t_txt.shape == (B, E)
    assert labels.shape == (B,)
    assert bool(jnp.all(jnp.isfinite(s_img)))
    assert bool(jnp.all(jnp.isfinite(s_txt)))
    assert bool(jnp.all(jnp.isfinite(t_txt)))
    print("KERNEL_OK")
</pallas_src>

<mosaic_0001>
module attributes {stable_mosaic.version = 11 : i64} {
  func.func @gnn_kernel(%arg0: i32, %arg1: memref<8x8xf32, #tpu.memory_space<vmem>>, %arg2: memref<8x16xbf16, #tpu.memory_space<vmem>>, %arg3: memref<1x16xf32, #tpu.memory_space<vmem>>, %arg4: memref<8x16xf32, #tpu.memory_space<vmem>>) attributes {dimension_semantics = [#tpu.dimension_semantics<parallel>], iteration_bounds = array<i64: 1>, scalar_prefetch = 0 : i64, scratch_operands = 0 : i64, tpu.core_type = #tpu.core_type<tc>, window_params = [{transform_indices = @transform_0, window_bounds = array<i64: 8, 8>}, {pipeline_mode = #tpu.pipeline_mode<synchronous>, transform_indices = @transform_1, window_bounds = array<i64: 8, 16>}, {pipeline_mode = #tpu.pipeline_mode<synchronous>, transform_indices = @transform_2, window_bounds = array<i64: 1, 16>}, {transform_indices = @transform_3, window_bounds = array<i64: 8, 16>}]} {
    %c0 = arith.constant 0 : index
    %c0_0 = arith.constant 0 : index
    %0 = vector.load %arg1[%c0, %c0_0] : memref<8x8xf32, #tpu.memory_space<vmem>>, vector<8x8xf32>
    %1 = arith.truncf %0 : vector<8x8xf32> to vector<8x8xbf16>
    %c0_1 = arith.constant 0 : index
    %c0_2 = arith.constant 0 : index
    %2 = vector.load %arg2[%c0_1, %c0_2] : memref<8x16xbf16, #tpu.memory_space<vmem>>, vector<8x16xbf16>
    %cst = arith.constant dense<0.000000e+00> : vector<8x16xf32>
    %3 = tpu.matmul %1, %2, %cst {dimension_numbers = #tpu.dot_dimension_numbers<[1], [0], [0], [1], [0, 0, 1, 1], [], []>} : vector<8x8xbf16>, vector<8x16xbf16>, vector<8x16xf32> -> vector<8x16xf32>
    %c0_3 = arith.constant 0 : index
    %c0_4 = arith.constant 0 : index
    %4 = vector.load %arg3[%c0_3, %c0_4] : memref<1x16xf32, #tpu.memory_space<vmem>>, vector<1x16xf32>
    %5 = vector.broadcast %4 : vector<1x16xf32> to vector<8x16xf32>
    %6 = arith.addf %3, %5 : vector<8x16xf32>
    %7 = arith.mulf %6, %6 : vector<8x16xf32>
    %cst_5 = arith.constant dense<0.000000e+00> : vector<8xf32>
    %8 = vector.multi_reduction <add>, %7, %cst_5 [1] : vector<8x16xf32> to vector<8xf32>
    %9 = vector.shape_cast %8 : vector<8xf32> to vector<8x1xf32>
    %10 = math.rsqrt %9 : vector<8x1xf32>
    %11 = vector.broadcast %10 : vector<8x1xf32> to vector<8x16xf32>
    %12 = arith.mulf %6, %11 : vector<8x16xf32>
    %c0_6 = arith.constant 0 : index
    %c0_7 = arith.constant 0 : index
    %13 = vector.load %arg4[%c0_6, %c0_7] : memref<8x16xf32, #tpu.memory_space<vmem>>, vector<8x16xf32>
    tpu.vector_store %arg4[%c0_6, %c0_7], %12 {strides = array<i32>} : memref<8x16xf32, #tpu.memory_space<vmem>>, vector<8x16xf32>,
    return
  }
  func.func @transform_0(%arg0: i32) -> (i32, i32) {
    %c0_i32 = arith.constant 0 : i32
    %c0_i32_0 = arith.constant 0 : i32
    return %arg0, %c0_i32 : i32, i32
  }
  func.func @transform_1(%arg0: i32) -> (i32, i32) {
    %c0_i32 = arith.constant 0 : i32
    %c0_i32_0 = arith.constant 0 : i32
    %c0_i32_1 = arith.constant 0 : i32
    return %c0_i32, %c0_i32_0 : i32, i32
  }
  func.func @transform_2(%arg0: i32) -> (i32, i32) {
    %c0_i32 = arith.constant 0 : i32
    %c0_i32_0 = arith.constant 0 : i32
    %c0_i32_1 = arith.constant 0 : i32
    return %c0_i32, %c0_i32_0 : i32, i32
  }
  func.func @transform_3(%arg0: i32) -> (i32, i32) {
    %c0_i32 = arith.constant 0 : i32
    %c0_i32_0 = arith.constant 0 : i32
    return %arg0, %c0_i32 : i32, i32
  }
}

</mosaic_0001>

<llo_original>
// kernel: tpu_custom_call.1
$region0: #{tpu_custom_call.1}
  #allocation0 [shape = 'u32[]', space=smem, size = 0x4, offset = 0x4, fixed_abs, tag = 'smem constant byte address 0x4 - core index']
  #allocation1 [shape = 'u32[144,128]{1,0:T(1,128)}', space=vmem, size = 0x12000, scoped, tag = 'internal scratch']
  %s0 = inlined_call_operand.hbm [shape: f32[8,8], index: 0, kind: input, shape index: {}]
  %s1 = inlined_call_operand.hbm [shape: bf16[8,16], index: 1, kind: input, shape index: {}]
  %s2 = inlined_call_operand.vmem [shape: f32[1,16], index: 2, kind: input, shape index: {}]
  %s3 = inlined_call_operand.hbm [shape: f32[8,16], index: 3, kind: output, shape index: {}]
  %s4 = sld [smem:[#allocation0]]
  $region30: #{tpu_custom_call.1} parent=0
    _
  %s6 = ssub.s32 1, %s4
  %s7 = scalar_select 0, %s6, %s4
  $region1: #{tpu_custom_call.1} parent=0
    #allocation2 [shape = 'u8[4096]{0}', space=vmem, size = 0x1000, scoped, tag = 'input window, operand 0, single buffered']
    #allocation3 [shape = 's32[1]{0}', space=sflag, size = 0x4, scoped, tag = 'scoped memory for tpu_custom_call.1']
    #allocation4 [shape = 's32[1]{0}', space=sflag, size = 0x4, scoped, tag = 'scoped memory for tpu_custom_call.1']
    #allocation5 [shape = 'u8[2048]{0}', space=vmem, size = 0x800, scoped, tag = 'input window, operand 1, single buffered']
    #allocation6 [shape = 's32[1]{0}', space=sflag, size = 0x4, scoped, tag = 'scoped memory for tpu_custom_call.1']
    #allocation7 [shape = 'u8[4096]{0}', space=vmem, size = 0x1000, scoped, tag = 'output window, operand 0, single buffered']
    %8 = vsyncpa [#allocation3], 0
    %9 = vsyncpa [#allocation6], 0
    %10 = vsyncpa [#allocation4], 0
    // Predicated region
    $region2: #{tpu_custom_call.1} parent=1 // pred_check
      _
    $region3: #{tpu_custom_call.1} parent=1 // pred_check_branch
      %12 = sbr.rel (0) target = $region5
    $region4: #{tpu_custom_call.1} parent=1 // pred_region
      %s14 = ssub.s32 128, 128
      %15 = vsyncadd [#allocation3], %s14
      %s17 = sshll.u32 [#allocation2], 4
      %s18 = int_to_ptr.vmem [resolvable:$true] %s17
      %20 = dma.hbm_to_vmem [thread:$0]  %s0, 128, %s18, [#allocation3]
    $region5: #{tpu_custom_call.1} parent=1 // pred_fallthru
      _
    // Predicated region
    $region6: #{tpu_custom_call.1} parent=1 // pred_check
      _
    $region7: #{tpu_custom_call.1} parent=1 // pred_check_branch
      %22 = sbr.rel (0) target = $region9
    $region8: #{tpu_custom_call.1} parent=1 // pred_region
      %s24 = ssub.s32 64, 64
      %25 = vsyncadd [#allocation6], %s24
      %s27 = sshll.u32 [#allocation5], 4
      %s28 = int_to_ptr.vmem [resolvable:$true] %s27
      %30 = dma.hbm_to_vmem [thread:$0]  %s1, 64, %s28, [#allocation6]
    $region9: #{tpu_custom_call.1} parent=1 // pred_fallthru
      _
    // Predicated region
    $region10: #{tpu_custom_call.1} parent=1 // pred_check
      _
    $region11: #{tpu_custom_call.1} parent=1 // pred_check_branch
      %32 = sbr.rel (0) target = $region13
    $region12: #{tpu_custom_call.1} parent=1 // pred_region
      _
    $region13: #{tpu_custom_call.1} parent=1 // pred_fallthru
      _
    // Predicated region
    $region14: #{tpu_custom_call.1} parent=1 // pred_check
      _
    $region15: #{tpu_custom_call.1} parent=1 // pred_check_branch
      %34 = sbr.rel (0) target = $region17
    $region16: #{tpu_custom_call.1} parent=1 // pred_region
      %35 = dma.done [#allocation3], 128
    $region17: #{tpu_custom_call.1} parent=1 // pred_fallthru
      _
    // Predicated region
    $region18: #{tpu_custom_call.1} parent=1 // pred_check
      _
    $region19: #{tpu_custom_call.1} parent=1 // pred_check_branch
      %37 = sbr.rel (0) target = $region21
    $region20: #{tpu_custom_call.1} parent=1 // pred_region
      %38 = dma.done [#allocation6], 64
    $region21: #{tpu_custom_call.1} parent=1 // pred_fallthru
      _
    %v40 = vld [vmem:[#allocation2] sm:$0xff]
    %v41 = vpack.c.bf16 %v40, %v40
    %v42 = vld [vmem:[#allocation5] sm:$0xf]
    %v43 = vld [vmem:[%s2] sm:$0x1]
    %v45 = vlaneseq
    %v46 = vshrl.u32 %v45, 7
    %v47 = vsub.s32 0, %v46
    %v48 = vrot.slane %v43, %v47
    %vm50 = vcmask 64512
    %v52 = vsel %vm50, %v41, 0
    %vm54 = vcmask 1043456
    %v56 = vsel %vm54, %v42, 0
    %58 = vmatprep.subr.bf16.mxu0 0
    %59 = vmatpush1.bf16.msra.mxu0 0
    %60 = vmatprep.subr.bf16.mxu0 0
    %61 = vmatpush1.bf16.msra.mxu0 0
    %62 = vmatprep.subr.bf16.mxu0 0
    %63 = vmatpush1.bf16.msra.mxu0 0
    %64 = vmatprep.subr.bf16.mxu0 0
    %65 = vmatpush1.bf16.msra.mxu0 0
    %66 = vmatprep.subr.bf16.mxu0 0
    %67 = vmatpush1.bf16.msra.mxu0 0
    %68 = vmatprep.subr.bf16.mxu0 0
    %69 = vmatpush1.bf16.msra.mxu0 0
    %70 = vmatprep.subr.bf16.mxu0 0
    %71 = vmatpush1.bf16.msra.mxu0 0
    %72 = vmatprep.subr.bf16.mxu0 0
    %73 = vmatpush1.bf16.msra.mxu0 %v56
    %74 = vmatprep.subr.bf16.mxu0 0
    %75 = vmatpush2.bf16.msra.mxu0 0
    %76 = vmatprep.subr.bf16.mxu0 0
    %77 = vmatpush2.bf16.msra.mxu0 0
    %78 = vmatprep.subr.bf16.mxu0 0
    %79 = vmatpush2.bf16.msra.mxu0 0
    %80 = vmatprep.subr.bf16.mxu0 0
    %81 = vmatpush2.bf16.msra.mxu0 0
    %82 = vmatprep.subr.bf16.mxu0 0
    %83 = vmatpush2.bf16.msra.mxu0 0
    %84 = vmatprep.subr.bf16.mxu0 0
    %85 = vmatpush2.bf16.msra.mxu0 0
    %86 = vmatprep.subr.bf16.mxu0 0
    %87 = vmatpush2.bf16.msra.mxu0 0
    %88 = vmatprep.subr.bf16.mxu0 0
    %89 = vmatpush2.bf16.msra.mxu0 0
    %90 = vmatprep.mubr.bf16.mxu0 0
    %91 = vmatmul.mubr.bf16.gmra.mxu0 %v52
    %v92 = vpop.f32.mrf.mxu0
    %v93 = vadd.f32 %v48, %v92
    %v94 = vpop.f32.mrf.mxu0
    %v95 = vpop.f32.mrf.mxu0
    %v96 = vpop.f32.mrf.mxu0
    %97 = vdwg.mxu0
    %v98 = vmul.f32 %v93, %v93
    %vm99 = vcmask 130048
    %v100 = vsel %vm99, %v98, 0.0
    %101 = vadd.xlane.f32.xlu0 %v100
    %v102 = vpop.xlane.xlu0 %101
    %v103 = vrsqrt.pop %v102
    %v104 = vmul.f32 %v93, %v103
    %105 = vst.msk [vmem:[#allocation7] sm:$0xff] %vm99, %v104
    // Predicated region
    $region22: #{tpu_custom_call.1} parent=1 // pred_check
      _
    $region23: #{tpu_custom_call.1} parent=1 // pred_check_branch
      %107 = sbr.rel (0) target = $region25
    $region24: #{tpu_custom_call.1} parent=1 // pred_region
      %s109 = ssub.s32 128, 128
      %110 = vsyncadd [#allocation4], %s109
      %s112 = sshll.u32 [#allocation7], 4
      %s113 = int_to_ptr.vmem [resolvable:$true] %s112
      %115 = dma.vmem_to_hbm [thread:$0]  %s113, 128, %s3, [#allocation4]
    $region25: #{tpu_custom_call.1} parent=1 // pred_fallthru
      _
    // Predicated region
    $region26: #{tpu_custom_call.1} parent=1 // pred_check
      _
    $region27: #{tpu_custom_call.1} parent=1 // pred_check_branch
      %117 = sbr.rel (0) target = $region29
    $region28: #{tpu_custom_call.1} parent=1 // pred_region
      %118 = dma.done [#allocation4], 128
    $region29: #{tpu_custom_call.1} parent=1 // pred_fallthru
      _
    %119 = vsyncpa [#allocation3], 1
    %120 = vsyncpa [#allocation6], 1
    %121 = vsyncpa [#allocation4], 1

</llo_original>
